<compile_context>
chip_gen: v5e
topology: v5e:2x2
jax: 0.10.0
libtpu: 0.0.40
codegen_flags: <defaults>
</compile_context>

<pallas_src>
import functools

import jax
import jax.numpy as jnp
from jax.experimental import pallas as pl
from jax.experimental.pallas import tpu as pltpu

LN_EPS = 1e-5


def _round_up(n, m):
    return ((n + m - 1) // m) * m


def _cdiv(a, b):
    return -(-a // b)


def transmlp_kernel(x_ref, w_ref, p_ref, o_ref, *, num_layers, true_d):
    """One row tile [TM, Dp]; all L layers applied in-kernel.

    x_ref: [TM, Dp]  input activation (native dtype)
    w_ref: [L, Dp, Dp] pre-transposed weights [in, out] (f32 or bf16), resident
    p_ref: [L, 3, Dp]  packed f32 (bias, gamma, beta), resident
    o_ref: [TM, Dp]  f32 carried activation / final output
    """
    dp = o_ref.shape[-1]
    inv_d = jnp.float32(1.0 / true_d)

    # Lane mask for LN statistics when the feature dim is zero-padded to the
    # 128-lane width.  Hoisted out of the layer loop.
    if dp != true_d:
        lane = jax.lax.broadcasted_iota(jnp.int32, (1, dp), 1)
        mask = (lane < true_d).astype(jnp.float32)
    else:
        mask = None

    # Carried f32 activation lives in the resident output VMEM block.
    o_ref[...] = x_ref[...].astype(jnp.float32)

    matmul_dtype = w_ref.dtype

    def layer(l, carry):
        x = o_ref[...]                       # [TM, Dp] f32
        w = w_ref[l]                         # [Dp, Dp] pre-transposed [in, out]
        params = p_ref[l]                    # [3, Dp] packed (bias, gamma, beta)
        b = params[0:1, :]
        gamma = params[1:2, :]
        beta = params[2:3, :]

        # fc0: MXU matmul (bf16 operands when weights are bf16; f32 accumulate)
        lhs = x if matmul_dtype == jnp.float32 else x.astype(matmul_dtype)
        y = jnp.dot(lhs, w, preferred_element_type=jnp.float32) + b

        # norm0: LayerNorm over the true feature dim, two-pass statistics.
        # Pad lanes of y are exactly zero (zero-padded W cols / bias), so the
        # plain lane-sum equals the sum over the true lanes.
        mean = jnp.sum(y, axis=-1, keepdims=True) * inv_d
        dev = y - mean
        if mask is not None:
            dev = dev * mask                 # zero the pad lanes before var
        var = jnp.sum(dev * dev, axis=-1, keepdims=True) * inv_d
        y_n = dev * jax.lax.rsqrt(var + LN_EPS)

        # residual carry (f32); gamma/beta pad lanes are zero -> pad lanes stay 0
        o_ref[...] = x + y_n * gamma + beta
        return carry

    jax.lax.fori_loop(0, num_layers, layer, 0)


def trans_mlp(x, w, b, gamma, beta, *, tm=2048, weight_dtype=jnp.bfloat16,
              core_parallel=False):
    """x: [B, N, D]; w: [L, D, D] (torch [out, in]); b/gamma/beta: [L, 1, D].

    weight_dtype: storage dtype of the weight stack fed to the MXU (bf16
    halves weight HBM/VMEM bytes; use jnp.float32 for exact f32 parity).
    core_parallel: use pltpu.CORE_PARALLEL on the row-tile axis (v7x 2-TC).
    """
    B, N, D = x.shape
    L = w.shape[0]
    M = B * N

    # --- feature dim padded up to the 128-lane width (lane-dense stores) ---
    dp = _round_up(D, 128)

    # --- row-tile sizing: multiple of 8, >=2 tiles when possible, VMEM budget ---
    x_bytes = jnp.dtype(x.dtype).itemsize
    w_bytes = jnp.dtype(weight_dtype).itemsize

    def vmem_need(tm_):
        tile_in = tm_ * dp * x_bytes
        tile_out = tm_ * dp * 4
        wstack = L * dp * dp * w_bytes
        pstack = L * 3 * dp * 4
        # double-buffered row tiles; resident stacks are fetched once but the
        # pipeline still allocates two buffers for them
        return 2 * (tile_in + tile_out) + 2 * (wstack + pstack)

    VMEM_BUDGET = 40 * 1024 * 1024   # conservative: fits under v7x's 64 MiB
    tm_eff = max(8, _round_up(min(tm, M), 8))
    if M > 8:
        # cap so at least two row tiles exist (cross-core sharding on v7x)
        tm_eff = min(tm_eff, max(8, _round_up(_cdiv(M, 2), 8)))
    while tm_eff > 8 and vmem_need(tm_eff) > VMEM_BUDGET:
        tm_eff = max(8, _round_up(tm_eff // 2, 8))

    m_pad = _round_up(M, tm_eff)

    # --- one-time wrapper transforms (no f32 pre-cast of the activation) ---
    x2 = x.reshape(M, D)
    if m_pad != M or dp != D:
        x2 = jnp.pad(x2, ((0, m_pad - M), (0, dp - D)))

    w_t = jnp.swapaxes(w, 1, 2)                               # [L, D_in, D_out]
    if dp != D:
        w_t = jnp.pad(w_t, ((0, 0), (0, dp - D), (0, dp - D)))
    w_t = w_t.astype(weight_dtype)

    p = jnp.concatenate([b, gamma, beta], axis=1).astype(jnp.float32)  # [L,3,D]
    if dp != D:
        p = jnp.pad(p, ((0, 0), (0, 0), (0, dp - D)))          # pad: b=γ=β=0

    grid = (m_pad // tm_eff,)
    row_sem = pltpu.CORE_PARALLEL if core_parallel else "parallel"
    vmem_limit = int(min(max(vmem_need(tm_eff) + (4 << 20), 32 << 20), 48 << 20))

    kernel = functools.partial(transmlp_kernel, num_layers=L, true_d=D)
    out = pl.pallas_call(
        kernel,
        out_shape=jax.ShapeDtypeStruct((m_pad, dp), jnp.float32),
        grid_spec=pltpu.PrefetchScalarGridSpec(
            num_scalar_prefetch=0,
            grid=grid,
            in_specs=[
                pl.BlockSpec((tm_eff, dp), lambda i: (i, 0)),    # row tile of x
                pl.BlockSpec((L, dp, dp), lambda i: (0, 0, 0)),  # resident weights
                pl.BlockSpec((L, 3, dp), lambda i: (0, 0, 0)),   # resident params
            ],
            out_specs=pl.BlockSpec((tm_eff, dp), lambda i: (i, 0)),
        ),
        compiler_params=pltpu.CompilerParams(
            dimension_semantics=(row_sem,),
            vmem_limit_bytes=vmem_limit),
    )(x2, w_t, p)

    return out[:M, :D].reshape(B, N, D).astype(x.dtype)


def reference_trans_mlp(x, w, b, gamma, beta):
    """Pure-JAX f32 reference mirroring the PyTorch forward."""
    L = w.shape[0]
    x = x.astype(jnp.float32)
    for l in range(L):
        y = jnp.einsum("bnd,od->bno", x, w[l]) + b[l][0]
        mean = jnp.mean(y, axis=-1, keepdims=True)
        var = jnp.mean(jnp.square(y - mean), axis=-1, keepdims=True)
        y = (y - mean) * jax.lax.rsqrt(var + LN_EPS)
        y = y * gamma[l][0] + beta[l][0]
        x = x + y
    return x


def init_params(key, num_layers, dims):
    # nn.init.xavier_uniform_(weight, gain=1e-8): U(-a, a), a = gain*sqrt(6/(fan_in+fan_out))
    bound = 1e-8 * jnp.sqrt(6.0 / (dims + dims))
    w = jax.random.uniform(key, (num_layers, dims, dims), jnp.float32,
                           minval=-bound, maxval=bound)
    b = jnp.zeros((num_layers, 1, dims), jnp.float32)       # fc bias = 0
    gamma = jnp.ones((num_layers, 1, dims), jnp.float32)    # LayerNorm weight
    beta = jnp.zeros((num_layers, 1, dims), jnp.float32)    # LayerNorm bias
    return w, b, gamma, beta


if __name__ == "__main__":
    B, N, D = 2, 16, 32      # batch, tokens, dims
    L = 4                    # num_layers

    key = jax.random.PRNGKey(0)
    k_x, k_w, k_g, k_be = jax.random.split(key, 4)
    x = jax.random.normal(k_x, (B, N, D), jnp.float32)
    w, b, gamma, beta = init_params(k_w, L, D)
    # perturb affine params slightly so the gamma/beta wiring is exercised
    gamma = gamma + 0.05 * jax.random.normal(k_g, gamma.shape, jnp.float32)
    beta = beta + 0.01 * jax.random.normal(k_be, beta.shape, jnp.float32)

    ref = reference_trans_mlp(x, w, b, gamma, beta)

    # 1) exact f32-weight path (default tm -> 2 row tiles here, D padded to 128)
    out_f32 = jax.block_until_ready(
        trans_mlp(x, w, b, gamma, beta, weight_dtype=jnp.float32))
    if not jnp.allclose(out_f32, ref, atol=1e-4, rtol=1e-4):
        raise AssertionError("Pallas TransMLP (f32 weights) mismatch vs reference")

    # 2) small-tile path (tm=8 -> 4 row tiles, exercises row padding/tiling)
    out_tiled = jax.block_until_ready(
        trans_mlp(x, w, b, gamma, beta, tm=8, weight_dtype=jnp.float32))
    if not jnp.allclose(out_tiled, ref, atol=1e-4, rtol=1e-4):
        raise AssertionError("Pallas TransMLP (tiled rows) mismatch vs reference")

    # 3) bandwidth-optimized bf16-weight path; loose tolerance accounts for the
    #    deliberate weight/LHS quantization (accumulation & carry stay f32)
    out_bf16 = jax.block_until_ready(
        trans_mlp(x, w, b, gamma, beta, weight_dtype=jnp.bfloat16))
    if not jnp.allclose(out_bf16, ref, atol=1e-1, rtol=1e-1):
        raise AssertionError("Pallas TransMLP (bf16 weights) mismatch vs reference")

    print("KERNEL_OK")
</pallas_src>

<mosaic_0001>
module attributes {stable_mosaic.version = 11 : i64} {
  func.func @transmlp_kernel(%arg0: i32, %arg1: memref<16x128xf32, #tpu.memory_space<vmem>>, %arg2: memref<4x128x128xf32, #tpu.memory_space<vmem>>, %arg3: memref<4x3x128xf32, #tpu.memory_space<vmem>>, %arg4: memref<16x128xf32, #tpu.memory_space<vmem>>) attributes {dimension_semantics = [#tpu.dimension_semantics<parallel>], iteration_bounds = array<i64: 2>, scalar_prefetch = 0 : i64, scratch_operands = 0 : i64, tpu.core_type = #tpu.core_type<tc>, window_params = [{transform_indices = @transform_0, window_bounds = array<i64: 16, 128>}, {pipeline_mode = #tpu.pipeline_mode<synchronous>, transform_indices = @transform_1, window_bounds = array<i64: 4, 128, 128>}, {pipeline_mode = #tpu.pipeline_mode<synchronous>, transform_indices = @transform_2, window_bounds = array<i64: 4, 3, 128>}, {transform_indices = @transform_3, window_bounds = array<i64: 16, 128>}]} {
    %0 = tpu.iota {dimensions = array<i32: 1>} : vector<1x128xi32>
    %c32_i32 = arith.constant 32 : i32
    %1 = vector.broadcast %c32_i32 : i32 to vector<1x128xi32>
    %2 = arith.cmpi slt, %0, %1 : vector<1x128xi32>
    %3 = arith.extui %2 : vector<1x128xi1> to vector<1x128xi32>
    %4 = arith.sitofp %3 : vector<1x128xi32> to vector<1x128xf32>
    %c0 = arith.constant 0 : index
    %c0_0 = arith.constant 0 : index
    %5 = vector.load %arg1[%c0, %c0_0] : memref<16x128xf32, #tpu.memory_space<vmem>>, vector<16x128xf32>
    %c0_1 = arith.constant 0 : index
    %c0_2 = arith.constant 0 : index
    %6 = vector.load %arg4[%c0_1, %c0_2] : memref<16x128xf32, #tpu.memory_space<vmem>>, vector<16x128xf32>
    tpu.vector_store %arg4[%c0_1, %c0_2], %5 {strides = array<i32>} : memref<16x128xf32, #tpu.memory_space<vmem>>, vector<16x128xf32>,
    %cst = arith.constant 3.125000e-02 : f32
    %c0_i32 = arith.constant 0 : i32
    %c4_i32 = arith.constant 4 : i32
    %7 = arith.addi %c0_i32, %c4_i32 : i32
    %c1_i32 = arith.constant 1 : i32
    scf.for %arg5 = %c0_i32 to %7 step %c1_i32  : i32 {
      %c0_4 = arith.constant 0 : index
      %c0_5 = arith.constant 0 : index
      %8 = vector.load %arg4[%c0_4, %c0_5] : memref<16x128xf32, #tpu.memory_space<vmem>>, vector<16x128xf32>
      %9 = arith.index_cast %arg5 : i32 to index
      %c0_6 = arith.constant 0 : index
      %c0_7 = arith.constant 0 : index
      %10 = vector.load %arg2[%9, %c0_6, %c0_7] : memref<4x128x128xf32, #tpu.memory_space<vmem>>, vector<1x128x128xf32>
      %11 = vector.shape_cast %10 : vector<1x128x128xf32> to vector<128x128xf32>
      %12 = arith.index_cast %arg5 : i32 to index
      %c0_8 = arith.constant 0 : index
      %c0_9 = arith.constant 0 : index
      %13 = vector.load %arg3[%12, %c0_8, %c0_9] : memref<4x3x128xf32, #tpu.memory_space<vmem>>, vector<1x3x128xf32>
      %14 = vector.shape_cast %13 : vector<1x3x128xf32> to vector<3x128xf32>
      %15 = vector.extract_strided_slice %14 {offsets = [0, 0], sizes = [1, 128], strides = [1, 1]} : vector<3x128xf32> to vector<1x128xf32>
      %16 = vector.extract_strided_slice %14 {offsets = [1, 0], sizes = [1, 128], strides = [1, 1]} : vector<3x128xf32> to vector<1x128xf32>
      %17 = vector.extract_strided_slice %14 {offsets = [2, 0], sizes = [1, 128], strides = [1, 1]} : vector<3x128xf32> to vector<1x128xf32>
      %cst_10 = arith.constant dense<0.000000e+00> : vector<16x128xf32>
      %18 = tpu.matmul %8, %11, %cst_10 {dimension_numbers = #tpu.dot_dimension_numbers<[1], [0], [0], [1], [0, 0, 1, 1], [], []>} : vector<16x128xf32>, vector<128x128xf32>, vector<16x128xf32> -> vector<16x128xf32>
      %19 = vector.broadcast %15 : vector<1x128xf32> to vector<16x128xf32>
      %20 = arith.addf %18, %19 : vector<16x128xf32>
      %cst_11 = arith.constant dense<0.000000e+00> : vector<16xf32>
      %21 = vector.multi_reduction <add>, %20, %cst_11 [1] : vector<16x128xf32> to vector<16xf32>
      %22 = vector.shape_cast %21 : vector<16xf32> to vector<16x1xf32>
      %23 = vector.broadcast %cst : f32 to vector<16x1xf32>
      %24 = arith.mulf %22, %23 : vector<16x1xf32>
      %25 = vector.broadcast %24 : vector<16x1xf32> to vector<16x128xf32>
      %26 = arith.subf %20, %25 : vector<16x128xf32>
      %27 = vector.broadcast %4 : vector<1x128xf32> to vector<16x128xf32>
      %28 = arith.mulf %26, %27 : vector<16x128xf32>
      %29 = arith.mulf %28, %28 : vector<16x128xf32>
      %cst_12 = arith.constant dense<0.000000e+00> : vector<16xf32>
      %30 = vector.multi_reduction <add>, %29, %cst_12 [1] : vector<16x128xf32> to vector<16xf32>
      %31 = vector.shape_cast %30 : vector<16xf32> to vector<16x1xf32>
      %32 = vector.broadcast %cst : f32 to vector<16x1xf32>
      %33 = arith.mulf %31, %32 : vector<16x1xf32>
      %cst_13 = arith.constant 9.99999974E-6 : f32
      %34 = vector.broadcast %cst_13 : f32 to vector<16x1xf32>
      %35 = arith.addf %33, %34 : vector<16x1xf32>
      %36 = math.rsqrt %35 : vector<16x1xf32>
      %37 = vector.broadcast %36 : vector<16x1xf32> to vector<16x128xf32>
      %38 = arith.mulf %28, %37 : vector<16x128xf32>
      %39 = vector.broadcast %16 : vector<1x128xf32> to vector<16x128xf32>
      %40 = arith.mulf %38, %39 : vector<16x128xf32>
      %41 = arith.addf %8, %40 : vector<16x128xf32>
      %42 = vector.broadcast %17 : vector<1x128xf32> to vector<16x128xf32>
      %43 = arith.addf %41, %42 : vector<16x128xf32>
      %c0_14 = arith.constant 0 : index
      %c0_15 = arith.constant 0 : index
      %44 = vector.load %arg4[%c0_14, %c0_15] : memref<16x128xf32, #tpu.memory_space<vmem>>, vector<16x128xf32>
      tpu.vector_store %arg4[%c0_14, %c0_15], %43 {strides = array<i32>} : memref<16x128xf32, #tpu.memory_space<vmem>>, vector<16x128xf32>,
    }
    %c4_i32_3 = arith.constant 4 : i32
    return
  }
  func.func @transform_0(%arg0: i32) -> (i32, i32) {
    %c0_i32 = arith.constant 0 : i32
    %c0_i32_0 = arith.constant 0 : i32
    return %arg0, %c0_i32 : i32, i32
  }
  func.func @transform_1(%arg0: i32) -> (i32, i32, i32) {
    %c0_i32 = arith.constant 0 : i32
    %c0_i32_0 = arith.constant 0 : i32
    %c0_i32_1 = arith.constant 0 : i32
    %c0_i32_2 = arith.constant 0 : i32
    return %c0_i32, %c0_i32_0, %c0_i32_1 : i32, i32, i32
  }
  func.func @transform_2(%arg0: i32) -> (i32, i32, i32) {
    %c0_i32 = arith.constant 0 : i32
    %c0_i32_0 = arith.constant 0 : i32
    %c0_i32_1 = arith.constant 0 : i32
    %c0_i32_2 = arith.constant 0 : i32
    return %c0_i32, %c0_i32_0, %c0_i32_1 : i32, i32, i32
  }
  func.func @transform_3(%arg0: i32) -> (i32, i32) {
    %c0_i32 = arith.constant 0 : i32
    %c0_i32_0 = arith.constant 0 : i32
    return %arg0, %c0_i32 : i32, i32
  }
}

</mosaic_0001>

<llo_original>
// kernel: tpu_custom_call.1
$region0: #{tpu_custom_call.1}
  #allocation0 [shape = 'u32[]', space=smem, size = 0x4, offset = 0x4, fixed_abs, tag = 'smem constant byte address 0x4 - core index']
  #allocation1 [shape = 'u32[72,128]{1,0:T(1,128)}', space=vmem, size = 0x9000, scoped, tag = 'internal scratch']
  %s0 = inlined_call_operand.hbm [shape: f32[32,128], index: 0, kind: input, shape index: {}]
  %s1 = inlined_call_operand.hbm [shape: f32[4,128,128], index: 1, kind: input, shape index: {}]
  %s2 = inlined_call_operand.vmem [shape: f32[4,3,128], index: 2, kind: input, shape index: {}]
  %s3 = inlined_call_operand.hbm [shape: f32[32,128], index: 3, kind: output, shape index: {}]
  %s4 = sld [smem:[#allocation0]]
  $region60: #{tpu_custom_call.1} parent=0
    _
  %s6 = ssub.s32 1, %s4
  %s7 = scalar_select 0, %s6, %s4
  $region1: #{tpu_custom_call.1} parent=0
    #allocation2 [shape = 'u8[16384]{0}', space=vmem, size = 0x4000, scoped, tag = 'input window, operand 0']
    #allocation3 [shape = 's32[2]{0}', space=sflag, size = 0x8, scoped, tag = 'scoped memory for tpu_custom_call.1']
    #allocation4 [shape = 's32[2]{0}', space=sflag, size = 0x8, scoped, tag = 'scoped memory for tpu_custom_call.1']
    #allocation5 [shape = 'u8[262144]{0}', space=vmem, size = 0x40000, scoped, tag = 'input window, operand 1, single buffered']
    #allocation6 [shape = 's32[1]{0}', space=sflag, size = 0x4, scoped, tag = 'scoped memory for tpu_custom_call.1']
    #allocation7 [shape = 'u8[16384]{0}', space=vmem, size = 0x4000, scoped, tag = 'output window, operand 0']
    %8 = vsyncpa [#allocation3], 0
    %s9 = scalar_lea.sflag [#allocation3], 1
    %10 = vsyncpa %s9, 0
    %11 = vsyncpa [#allocation6], 0
    %12 = vsyncpa [#allocation4], 0
    %s13 = scalar_lea.sflag [#allocation4], 1
    %14 = vsyncpa %s13, 0
    loop: start=0, step=1, limit=4
    $region2: #{tpu_custom_call.1} parent=1 // loop_pre_header
      _
    $region3: #{tpu_custom_call.1} parent=1 // loop_header
      %s16 = sphi 0, %s20
      %p17 = scmp.ge.s32.totalorder %s16, 4
      %s26 = sphi 0, %s28
      %s29 = sphi 0, %s26
      %s30 = sphi 0, %s29
      %s46 = sphi 0, %s30
      %s50 = sphi 0, %s50
      %s52 = sphi 0, %s50
      %s53 = sphi 0, %s52
      %s67 = sphi 0, %s53
      %s71 = sphi 0, %s71
      %s73 = sphi 0, %s71
      %s74 = sphi 0, %s73
      %s88 = sphi 0, %s74
      %s94 = sphi 0, %s96
      %s97 = sphi 0, %s94
      %s98 = sphi 0, %s97
      %s114 = sphi 0, %s98
    $region4: #{tpu_custom_call.1} parent=1 // loop_header_branch
      %19 = sbr.rel (%p17) target = $region8
    $region5: #{tpu_custom_call.1} parent=1 // loop_body
      %s21 = ssub.s32 %s16, 1
      %s22 = ssub.s32 %s16, 2
      %s23 = sadd.s32 %s16, 1
      %s24 = ssub.s32 %s16, %s23
      %p25 = scmp.eq.s32.totalorder %s24, 0
      %s27 = sadd.s32 %s26, 1
      %s28 = scalar_select %p25, %s26, %s27
      %p31 = pneg %p25
      %p32 = scmp.eq.s32.totalorder %s16, 1
      %p33 = por %p31, %p32
      %p34 = scmp.ne.s32.totalorder %s26, %s29
      %p35 = scmp.eq.s32.totalorder %s16, 0
      %p36 = por %p34, %p35
      %p37 = scmp.ne.s32.totalorder %s26, %s29
      %p38 = scmp.eq.s32.totalorder %s21, 1
      %p39 = por %p37, %p38
      %p40 = scmp.ne.s32.totalorder %s29, %s30
      %p41 = scmp.eq.s32.totalorder %s21, 0
      %p42 = por %p40, %p41
      %p43 = scmp.ne.s32.totalorder %s29, %s30
      %p44 = scmp.eq.s32.totalorder %s22, 1
      %p45 = por %p43, %p44
      %p47 = scmp.ne.s32.totalorder %s30, %s46
      %p48 = scmp.eq.s32.totalorder %s22, 0
      %p49 = por %p47, %p48
      %s51 = sadd.s32 %s50, 1
      %p54 = scmp.eq.s32.totalorder %s16, 1
      %p55 = scmp.ne.s32.totalorder %s50, %s52
      %p56 = scmp.eq.s32.totalorder %s16, 0
      %p57 = por %p55, %p56
      %p58 = scmp.ne.s32.totalorder %s50, %s52
      %p59 = scmp.eq.s32.totalorder %s21, 1
      %p60 = por %p58, %p59
      %p61 = scmp.ne.s32.totalorder %s52, %s53
      %p62 = scmp.eq.s32.totalorder %s21, 0
      %p63 = por %p61, %p62
      %p64 = scmp.ne.s32.totalorder %s52, %s53
      %p65 = scmp.eq.s32.totalorder %s22, 1
      %p66 = por %p64, %p65
      %p68 = scmp.ne.s32.totalorder %s53, %s67
      %p69 = scmp.eq.s32.totalorder %s22, 0
      %p70 = por %p68, %p69
      %s72 = sadd.s32 %s71, 1
      %p75 = scmp.eq.s32.totalorder %s16, 1
      %p76 = scmp.ne.s32.totalorder %s71, %s73
      %p77 = scmp.eq.s32.totalorder %s16, 0
      %p78 = por %p76, %p77
      %p79 = scmp.ne.s32.totalorder %s71, %s73
      %p80 = scmp.eq.s32.totalorder %s21, 1
      %p81 = por %p79, %p80
      %p82 = scmp.ne.s32.totalorder %s73, %s74
      %p83 = scmp.eq.s32.totalorder %s21, 0
      %p84 = por %p82, %p83
      %p85 = scmp.ne.s32.totalorder %s73, %s74
      %p86 = scmp.eq.s32.totalorder %s22, 1
      %p87 = por %p85, %p86
      %p89 = scmp.ne.s32.totalorder %s74, %s88
      %p90 = scmp.eq.s32.totalorder %s22, 0
      %p91 = por %p89, %p90
      %s92 = ssub.s32 %s16, %s23
      %p93 = scmp.eq.s32.totalorder %s92, 0
      %s95 = sadd.s32 %s94, 1
      %s96 = scalar_select %p93, %s94, %s95
      %p99 = pneg %p93
      %p100 = scmp.eq.s32.totalorder %s16, 1
      %p101 = por %p99, %p100
      %p102 = scmp.ne.s32.totalorder %s94, %s97
      %p103 = scmp.eq.s32.totalorder %s16, 0
      %p104 = por %p102, %p103
      %p105 = scmp.ne.s32.totalorder %s94, %s97
      %p106 = scmp.eq.s32.totalorder %s21, 1
      %p107 = por %p105, %p106
      %p108 = scmp.ne.s32.totalorder %s97, %s98
      %p109 = scmp.eq.s32.totalorder %s21, 0
      %p110 = por %p108, %p109
      %p111 = scmp.ne.s32.totalorder %s97, %s98
      %p112 = scmp.eq.s32.totalorder %s22, 1
      %p113 = por %p111, %p112
      %p115 = scmp.ne.s32.totalorder %s98, %s114
      %p116 = scmp.eq.s32.totalorder %s22, 0
      %p117 = por %p115, %p116
      %p118 = scmp.le.s32.totalorder 1, %s16
      %p119 = scmp.lt.s32.totalorder %s16, 3
      %p120 = pnand %p118, %p119
      %p121 = pneg %p120
      // Predicated region
      $region9: #{tpu_custom_call.1} parent=5 // pred_check
        _
      $region10: #{tpu_custom_call.1} parent=5 // pred_check_branch
        %123 = sbr.rel (%p120) target = $region12
      $region11: #{tpu_custom_call.1} parent=5 // pred_region
        %s124 = ssub.s32 %s16, 1
        // Predicated region
        $region13: #{tpu_custom_call.1} parent=11 // pred_check
          %p125 = pneg %p63
        $region14: #{tpu_custom_call.1} parent=11 // pred_check_branch
          %127 = sbr.rel (%p125) target = $region16
        $region15: #{tpu_custom_call.1} parent=11 // pred_region
          %129 = vsyncadd [#allocation6], 0
          %s130 = sshll.u32 %s1, 4
          %s131 = int_to_ptr.hbm [resolvable:$true] %s130
          %s132 = sshll.u32 [#allocation5], 4
          %s133 = int_to_ptr.vmem [resolvable:$true] %s132
          %138 = dma.hbm_to_vmem [thread:$0]  %s131, 8192, %s133, [#allocation6], 128, 128, 8
        $region16: #{tpu_custom_call.1} parent=11 // pred_fallthru
          _
        // Predicated region
        $region17: #{tpu_custom_call.1} parent=11 // pred_check
          %p139 = pneg %p84
        $region18: #{tpu_custom_call.1} parent=11 // pred_check_branch
          %141 = sbr.rel (%p139) target = $region20
        $region19: #{tpu_custom_call.1} parent=11 // pred_region
          _
        $region20: #{tpu_custom_call.1} parent=11 // pred_fallthru
          _
      $region12: #{tpu_custom_call.1} parent=5 // pred_fallthru
        _
      %p142 = scmp.lt.s32.totalorder %s16, 2
      // Predicated region
      $region21: #{tpu_custom_call.1} parent=5 // pred_check
        %p143 = pneg %p142
      $region22: #{tpu_custom_call.1} parent=5 // pred_check_branch
        %145 = sbr.rel (%p143) target = $region24
      $region23: #{tpu_custom_call.1} parent=5 // pred_region
        // Predicated region
        $region25: #{tpu_custom_call.1} parent=23 // pred_check
          %p146 = pneg %p36
        $region26: #{tpu_custom_call.1} parent=23 // pred_check_branch
          %148 = sbr.rel (%p146) target = $region28
        $region27: #{tpu_custom_call.1} parent=23 // pred_region
          %s149 = sand.u32 %s26, 1
          %s150 = scalar_lea.sflag [#allocation3], %s149
          %s151 = sand.u32 %s26, 1
          %s152 = smul.addr %s151, 16
          %s153 = scalar_lea.vmem [#allocation2], %s152
          %s154 = smul.u32 2, %s16
          %156 = vsyncadd %s150, 0
          %s157 = smul.addr %s154, 8
          %s158 = scalar_lea.hbm %s0, %s157
          %s159 = sshll.u32 %s158, 4
          %s160 = int_to_ptr.hbm [resolvable:$true] %s159
          %s161 = sshll.u32 %s153, 4
          %s162 = int_to_ptr.vmem [resolvable:$true] %s161
          %167 = dma.hbm_to_vmem [thread:$0]  %s160, 256, %s162, %s150, 128, 128, 8
        $region28: #{tpu_custom_call.1} parent=23 // pred_fallthru
          _
      $region24: #{tpu_custom_call.1} parent=5 // pred_fallthru
        _
      %p168 = scmp.le.s32.totalorder 1, %s16
      %p169 = scmp.lt.s32.totalorder %s16, 3
      %p170 = pnand %p168, %p169
      %p171 = pneg %p170
      // Predicated region
      $region29: #{tpu_custom_call.1} parent=5 // pred_check
        _
      $region30: #{tpu_custom_call.1} parent=5 // pred_check_branch
        %173 = sbr.rel (%p170) target = $region32
      $region31: #{tpu_custom_call.1} parent=5 // pred_region
        %s174 = ssub.s32 %s16, 1
        %s175 = sand.u32 %s29, 1
        %s176 = scalar_lea.sflag [#allocation3], %s175
        %s177 = sand.u32 %s29, 1
        %s178 = smul.addr %s177, 16
        %s179 = scalar_lea.vmem [#allocation2], %s178
        // Predicated region
        $region33: #{tpu_custom_call.1} parent=31 // pred_check
          %p180 = pneg %p42
        $region34: #{tpu_custom_call.1} parent=31 // pred_check_branch
          %182 = sbr.rel (%p180) target = $region36
        $region35: #{tpu_custom_call.1} parent=31 // pred_region
          %184 = dma.done %s176, 256
        $region36: #{tpu_custom_call.1} parent=31 // pred_fallthru
          _
        // Predicated region
        $region37: #{tpu_custom_call.1} parent=31 // pred_check
          %p185 = pneg %p63
        $region38: #{tpu_custom_call.1} parent=31 // pred_check_branch
          %187 = sbr.rel (%p185) target = $region40
        $region39: #{tpu_custom_call.1} parent=31 // pred_region
          %189 = dma.done [#allocation6], 8192
        $region40: #{tpu_custom_call.1} parent=31 // pred_fallthru
          _
        %s190 = sand.u32 %s29, 1
        %s191 = scalar_lea.sflag [#allocation3], %s190
        %s192 = sand.u32 %s29, 1
        %s193 = smul.addr %s192, 16
        %s194 = scalar_lea.vmem [#allocation2], %s193
        %p195 = pneg %p42
        %p196 = pneg %p39
        %p197 = pneg %p63
        %p198 = pneg %p60
        %p199 = pneg %p84
        %p200 = pneg %p81
        %p201 = pneg %p110
        %p202 = pneg %p107
        %s203 = sand.u32 %s97, 1
        %s204 = scalar_lea.sflag [#allocation4], %s203
        %s205 = sand.u32 %s97, 1
        %s206 = smul.addr %s205, 16
        %s207 = scalar_lea.vmem [#allocation7], %s206
        %s208 = smul.u32 2, %s21
        %s209 = smul.u32 2, %s21
        %v210 = vlaneseq
        %v211 = vand.u32 %v210, 127
        %vm212 = vcmp.lt.s32.totalorder %v211, 32
        %v213 = vsel %vm212, 1, 0
        %v214 = vcvt.s32.f32 %v213
        %v215 = vld [vmem:[%s179] sm:$0xff]
        %v216 = vld [vmem:[%s179 + $0x8] sm:$0xff]
        %217 = vst [vmem:[%s207] sm:$0xff] %v215
        %218 = vst [vmem:[%s207 + $0x8] sm:$0xff] %v216
        loop: start=0, step=1, limit=4
        $region41: #{tpu_custom_call.1} parent=31 // loop_pre_header
          _
        $region42: #{tpu_custom_call.1} parent=31 // loop_header
          %s220 = sphi 0, %s224
          %p221 = scmp.ge.s32.totalorder %s220, 4
        $region43: #{tpu_custom_call.1} parent=31 // loop_header_branch
          %223 = sbr.rel (%p221) target = $region47
        $region44: #{tpu_custom_call.1} parent=31 // loop_body
          %v225 = vld [vmem:[%s207] sm:$0xff]
          %v226 = vld [vmem:[%s207 + $0x8] sm:$0xff]
          %s227 = smul.u32 %s220, 128
          %s228 = scalar_lea.vmem [#allocation5], %s227
          %v229 = vld [vmem:[%s228] sm:$0xff]
          %v230 = vld [vmem:[%s228 + $0x8] sm:$0xff]
          %v231 = vld [vmem:[%s228 + $0x10] sm:$0xff]
          %v232 = vld [vmem:[%s228 + $0x18] sm:$0xff]
          %v233 = vld [vmem:[%s228 + $0x20] sm:$0xff]
          %v234 = vld [vmem:[%s228 + $0x28] sm:$0xff]
          %v235 = vld [vmem:[%s228 + $0x30] sm:$0xff]
          %v236 = vld [vmem:[%s228 + $0x38] sm:$0xff]
          %v237 = vld [vmem:[%s228 + $0x40] sm:$0xff]
          %v238 = vld [vmem:[%s228 + $0x48] sm:$0xff]
          %v239 = vld [vmem:[%s228 + $0x50] sm:$0xff]
          %v240 = vld [vmem:[%s228 + $0x58] sm:$0xff]
          %v241 = vld [vmem:[%s228 + $0x60] sm:$0xff]
          %v242 = vld [vmem:[%s228 + $0x68] sm:$0xff]
          %v243 = vld [vmem:[%s228 + $0x70] sm:$0xff]
          %v244 = vld [vmem:[%s228 + $0x78] sm:$0xff]
          %s245 = smul.u32 %s220, 4
          %s246 = scalar_lea.vmem %s2, %s245
          %v247 = vld [vmem:[%s246] sm:$0x7]
          %v248 = vperm.slane %v247, 0
          %249 = vmatpush.msra.mxu0 %v244
          %250 = vmatpush.msra.mxu0 %v243
          %251 = vmatpush.msra.mxu0 %v242
          %252 = vmatpush.msra.mxu0 %v241
          %253 = vmatpush.msra.mxu0 %v240
          %254 = vmatpush.msra.mxu0 %v239
          %255 = vmatpush.msra.mxu0 %v238
          %256 = vmatpush.msra.mxu0 %v237
          %257 = vmatpush.msra.mxu0 %v236
          %258 = vmatpush.msra.mxu0 %v235
          %259 = vmatpush.msra.mxu0 %v234
          %260 = vmatpush.msra.mxu0 %v233
          %261 = vmatpush.msra.mxu0 %v232
          %262 = vmatpush.msra.mxu0 %v231
          %263 = vmatpush.msra.mxu0 %v230
          %264 = vmatpush.msra.mxu0 %v229
          %265 = vmatmul.f32.gmra.mxu0 %v225
          %v266 = vpop.f32.mrf.mxu0
          %v267 = vadd.f32 %v248, %v266
          %268 = vmatmul.f32.gmra.mxu0 %v226
          %v269 = vpop.f32.mrf.mxu0
          %v270 = vadd.f32 %v248, %v269
          %271 = vdwg.mxu0
          %272 = vadd.xlane.f32.xlu0 %v267
          %v273 = vpop.xlane.xlu0 %272
          %274 = vadd.xlane.f32.xlu0 %v270
          %v275 = vpop.xlane.xlu0 %274
          %v276 = vmul.f32 %v273, 0.03125
          %v277 = vmul.f32 %v275, 0.03125
          %v278 = vsub.f32 %v267, %v276
          %v279 = vsub.f32 %v270, %v277
          %v280 = vmul.f32 %v278, %v214
          %v281 = vmul.f32 %v279, %v214
          %v282 = vmul.f32 %v280, %v280
          %v283 = vmul.f32 %v281, %v281
          %284 = vadd.xlane.f32.xlu0 %v282
          %v285 = vpop.xlane.xlu0 %284
          %286 = vadd.xlane.f32.xlu0 %v283
          %v287 = vpop.xlane.xlu0 %286
          %v288 = vmul.f32 %v285, 0.03125
          %v289 = vmul.f32 %v287, 0.03125
          %v290 = vadd.f32 %v288, 1e-05
          %v291 = vadd.f32 %v289, 1e-05
          %v292 = vrsqrt.pop %v290
          %v293 = vmul.f32 %v292, %v290
          %v294 = vmul.f32 %v293, %v292
          %v295 = vmul.f32 0.5, %v294
          %v296 = vsub.f32 1.5, %v295
          %v297 = vmul.f32 %v292, %v296
          %vm298 = vweird.f32 %v290
          %vm299 = vweird.f32 %v292
          %vm300 = vmor %vm298, %vm299
          %v301 = vsel %vm300, %v292, %v297
          %v302 = vrsqrt.pop %v291
          %v303 = vmul.f32 %v302, %v291
          %v304 = vmul.f32 %v303, %v302
          %v305 = vmul.f32 0.5, %v304
          %v306 = vsub.f32 1.5, %v305
          %v307 = vmul.f32 %v302, %v306
          %vm308 = vweird.f32 %v291
          %vm309 = vweird.f32 %v302
          %vm310 = vmor %vm308, %vm309
          %v311 = vsel %vm310, %v302, %v307
          %v312 = vmul.f32 %v280, %v301
          %v313 = vmul.f32 %v281, %v311
          %v314 = vperm.slane %v247, 1
          %v315 = vmul.f32 %v312, %v314
          %v316 = vmul.f32 %v313, %v314
          %v317 = vadd.f32 %v225, %v315
          %v318 = vadd.f32 %v226, %v316
          %v319 = vperm.slane %v247, 2
          %v320 = vadd.f32 %v317, %v319
          %v321 = vadd.f32 %v318, %v319
          %322 = vst [vmem:[%s207] sm:$0xff] %v320
          %323 = vst [vmem:[%s207 + $0x8] sm:$0xff] %v321
        $region45: #{tpu_custom_call.1} parent=31 // loop_footer
          %s224 = sadd.s32 1, %s220
        $region46: #{tpu_custom_call.1} parent=31 // loop_footer_branch
          %219 = sbr.rel target = $region42
        $region47: #{tpu_custom_call.1} parent=31 // loop_exit
          _
        %s324 = sand.u32 %s97, 1
        %s325 = scalar_lea.sflag [#allocation4], %s324
        %s326 = sand.u32 %s97, 1
        %s327 = smul.addr %s326, 16
        %s328 = scalar_lea.vmem [#allocation7], %s327
        // Predicated region
        $region48: #{tpu_custom_call.1} parent=31 // pred_check
          %p329 = pneg %p107
        $region49: #{tpu_custom_call.1} parent=31 // pred_check_branch
          %331 = sbr.rel (%p329) target = $region51
        $region50: #{tpu_custom_call.1} parent=31 // pred_region
          %s332 = smul.u32 2, %s21
          %334 = vsyncadd %s325, 0
          %s335 = smul.addr %s332, 8
          %s336 = scalar_lea.hbm %s3, %s335
          %s337 = sshll.u32 %s328, 4
          %s338 = int_to_ptr.vmem [resolvable:$true] %s337
          %s339 = sshll.u32 %s336, 4
          %s340 = int_to_ptr.hbm [resolvable:$true] %s339
          %345 = dma.vmem_to_hbm [thread:$0]  %s338, 256, %s340, %s325, 128, 128, 8
        $region51: #{tpu_custom_call.1} parent=31 // pred_fallthru
          _
      $region32: #{tpu_custom_call.1} parent=5 // pred_fallthru
        _
      %p346 = scmp.le.s32.totalorder 2, %s16
      // Predicated region
      $region52: #{tpu_custom_call.1} parent=5 // pred_check
        %p347 = pneg %p346
      $region53: #{tpu_custom_call.1} parent=5 // pred_check_branch
        %349 = sbr.rel (%p347) target = $region55
      $region54: #{tpu_custom_call.1} parent=5 // pred_region
        %s350 = ssub.s32 %s16, 2
        // Predicated region
        $region56: #{tpu_custom_call.1} parent=54 // pred_check
          %p351 = pneg %p113
        $region57: #{tpu_custom_call.1} parent=54 // pred_check_branch
          %353 = sbr.rel (%p351) target = $region59
        $region58: #{tpu_custom_call.1} parent=54 // pred_region
          %s354 = sand.u32 %s98, 1
          %s355 = scalar_lea.sflag [#allocation4], %s354
          %s356 = sand.u32 %s98, 1
          %s357 = smul.addr %s356, 16
          %s358 = scalar_lea.vmem [#allocation7], %s357
          %360 = dma.done %s355, 256
        $region59: #{tpu_custom_call.1} parent=54 // pred_fallthru
          _
      $region55: #{tpu_custom_call.1} parent=5 // pred_fallthru
        _
    $region6: #{tpu_custom_call.1} parent=1 // loop_footer
      %s20 = sadd.s32 1, %s16
    $region7: #{tpu_custom_call.1} parent=1 // loop_footer_branch
      %15 = sbr.rel target = $region3
    $region8: #{tpu_custom_call.1} parent=1 // loop_exit
      _
    %361 = vsyncpa [#allocation3], 1
    %s362 = scalar_lea.sflag [#allocation3], 1
    %363 = vsyncpa %s362, 1
    %364 = vsyncpa [#allocation6], 1
    %365 = vsyncpa [#allocation4], 1
    %s366 = scalar_lea.sflag [#allocation4], 1
    %367 = vsyncpa %s366, 1

</llo_original>
